<compile_context>
chip_gen: v7x
topology: tpu7x:2x2x1
jax: 0.10.0
libtpu: 0.0.40
codegen_flags: <defaults>
</compile_context>

<pallas_src>
import jax
import jax.numpy as jnp
from jax.experimental import pallas as pl
from jax.experimental.pallas import tpu as pltpu


def _round_up(x, m):
    return ((x + m - 1) // m) * m


def _critic_kernel(s_ref, a_ref, w1s_ref, w1a_ref, b1_ref, w2_ref, b2_ref, o_ref):
    # s_ref  : [TB, s_dim]      a_ref  : [TB, a_dim]
    # w1s_ref: [s_dim, H]       w1a_ref: [a_dim, H]     b1_ref: [1, H]
    # w2_ref : [1, H]  (l2 weight as a row)             b2_ref: [1, 1] (SMEM)
    # o_ref  : [TB, 1]
    # Layer 1: fused concat -> two partial matmuls on the MXU, f32 accumulate.
    h = jnp.dot(s_ref[...], w1s_ref[...], preferred_element_type=jnp.float32)
    h = h + jnp.dot(a_ref[...], w1a_ref[...], preferred_element_type=jnp.float32)
    h = jnp.maximum(h + b1_ref[...], 0.0)                       # bias + ReLU (VPU)
    # Layer 2 (30 -> 1): multiply + lane reduce (VPU/XLU); scalar bias from SMEM.
    q = jnp.sum(h * w2_ref[...], axis=-1, keepdims=True) + b2_ref[0, 0]
    o_ref[...] = q.astype(o_ref.dtype)


def critic_forward(s, a, params, *, block_b=4096):
    """Pallas-backed CriticNetwork.forward(s, a) -> [B, 1] float32."""
    w1s, w1a, b1, w2, b2 = params
    B, s_dim = s.shape
    a_dim = a.shape[1]
    H = w1s.shape[1]

    # Batch tile: multiple of 8 (sublane aligned), capped near B so tiny
    # batches don't over-allocate.  No host-side padding: ragged final tiles
    # are handled by Pallas (OOB output rows are dropped).
    tb = min(_round_up(block_b, 8), _round_up(B, 8))
    grid = (pl.cdiv(B, tb),)

    out = pl.pallas_call(
        _critic_kernel,
        out_shape=jax.ShapeDtypeStruct((B, 1), jnp.float32),
        grid=grid,
        in_specs=[
            pl.BlockSpec((tb, s_dim), lambda i: (i, 0)),          # s tile (pipelined)
            pl.BlockSpec((tb, a_dim), lambda i: (i, 0)),          # a tile (pipelined)
            pl.BlockSpec((s_dim, H), lambda i: (0, 0)),           # W1[:s_dim] (resident)
            pl.BlockSpec((a_dim, H), lambda i: (0, 0)),           # W1[s_dim:] (resident)
            pl.BlockSpec((1, H), lambda i: (0, 0)),               # b1 (resident)
            pl.BlockSpec((1, H), lambda i: (0, 0)),               # W2 row (resident)
            pl.BlockSpec(memory_space=pltpu.MemorySpace.SMEM),    # b2 scalar in SMEM
        ],
        out_specs=pl.BlockSpec((tb, 1), lambda i: (i, 0)),
        compiler_params=pltpu.CompilerParams(
            dimension_semantics=("parallel",),
            vmem_limit_bytes=64 * 1024 * 1024,
        ),
    )(s, a, w1s, w1a, b1, w2, b2)

    return out


def init_params(key, s_dim, a_dim, hidden=30):
    """Init mimicking nn.Linear default (uniform +- 1/sqrt(fan_in)).

    W1 is stored pre-transposed ([in, out]) and split into the s-part and
    a-part so the kernel can fuse the concatenation.  W2 is stored as a
    (1, hidden) row for the elementwise-reduce path.
    """
    k1, k2, k3, k4 = jax.random.split(key, 4)
    fan1 = s_dim + a_dim
    lim1 = 1.0 / jnp.sqrt(jnp.float32(fan1))
    lim2 = 1.0 / jnp.sqrt(jnp.float32(hidden))
    w1 = jax.random.uniform(k1, (fan1, hidden), jnp.float32, -lim1, lim1)
    w1s, w1a = w1[:s_dim], w1[s_dim:]
    b1 = jax.random.uniform(k2, (1, hidden), jnp.float32, -lim1, lim1)
    w2 = jax.random.uniform(k3, (1, hidden), jnp.float32, -lim2, lim2)  # row layout
    b2 = jax.random.uniform(k4, (1, 1), jnp.float32, -lim2, lim2)
    return w1s, w1a, b1, w2, b2


def _reference(s, a, params):
    w1s, w1a, b1, w2, b2 = params
    x = jnp.concatenate([s, a], axis=1)
    w1 = jnp.concatenate([w1s, w1a], axis=0)
    h = jnp.maximum(x @ w1 + b1, 0.0)
    return h @ w2.T + b2


if __name__ == "__main__":
    key = jax.random.PRNGKey(0)
    ks, ka, kp, ks2, ka2, ks3, ka3 = jax.random.split(key, 7)

    s_dim, a_dim = 16, 4
    params = init_params(kp, s_dim, a_dim)

    # Small batch (single tile).
    batch = 8
    s = jax.random.normal(ks, (batch, s_dim), jnp.float32)
    a = jax.random.normal(ka, (batch, a_dim), jnp.float32)
    out = jax.block_until_ready(critic_forward(s, a, params))
    ref = _reference(s, a, params)
    assert out.shape == (batch, 1)
    assert jnp.allclose(out, ref, atol=1e-5, rtol=1e-5)

    # Non-tile-multiple batch: exercises the ragged final tile across a
    # multi-step pipelined grid (no host-side padding copies).
    batch2 = 300
    s2 = jax.random.normal(ks2, (batch2, s_dim), jnp.float32)
    a2 = jax.random.normal(ka2, (batch2, a_dim), jnp.float32)
    out2 = jax.block_until_ready(critic_forward(s2, a2, params, block_b=128))
    ref2 = _reference(s2, a2, params)
    assert out2.shape == (batch2, 1)
    assert jnp.allclose(out2, ref2, atol=1e-5, rtol=1e-5)

    # Tiny, non-multiple-of-8 batch: block larger than the array.
    batch3 = 5
    s3 = jax.random.normal(ks3, (batch3, s_dim), jnp.float32)
    a3 = jax.random.normal(ka3, (batch3, a_dim), jnp.float32)
    out3 = jax.block_until_ready(critic_forward(s3, a3, params))
    ref3 = _reference(s3, a3, params)
    assert out3.shape == (batch3, 1)
    assert jnp.allclose(out3, ref3, atol=1e-5, rtol=1e-5)

    print("KERNEL_OK")
</pallas_src>

<mosaic_0001>
module attributes {stable_mosaic.version = 11 : i64} {
  func.func @_critic_kernel(%arg0: i32, %arg1: memref<8x16xf32, #tpu.memory_space<vmem>>, %arg2: memref<8x4xf32, #tpu.memory_space<vmem>>, %arg3: memref<16x30xf32, #tpu.memory_space<vmem>>, %arg4: memref<4x30xf32, #tpu.memory_space<vmem>>, %arg5: memref<1x30xf32, #tpu.memory_space<vmem>>, %arg6: memref<1x30xf32, #tpu.memory_space<vmem>>, %arg7: memref<1x1xf32, #tpu.memory_space<smem>>, %arg8: memref<8x1xf32, #tpu.memory_space<vmem>>) attributes {dimension_semantics = [#tpu.dimension_semantics<parallel>], iteration_bounds = array<i64: 1>, scalar_prefetch = 0 : i64, scratch_operands = 0 : i64, tpu.core_type = #tpu.core_type<tc>, window_params = [{transform_indices = @transform_0, window_bounds = array<i64: 8, 16>}, {transform_indices = @transform_1, window_bounds = array<i64: 8, 4>}, {pipeline_mode = #tpu.pipeline_mode<synchronous>, transform_indices = @transform_2, window_bounds = array<i64: 16, 30>}, {pipeline_mode = #tpu.pipeline_mode<synchronous>, transform_indices = @transform_3, window_bounds = array<i64: 4, 30>}, {pipeline_mode = #tpu.pipeline_mode<synchronous>, transform_indices = @transform_4, window_bounds = array<i64: 1, 30>}, {pipeline_mode = #tpu.pipeline_mode<synchronous>, transform_indices = @transform_5, window_bounds = array<i64: 1, 30>}, {transform_indices = @transform_6, window_bounds = array<i64: 1, 1>}, {transform_indices = @transform_7, window_bounds = array<i64: 8, 1>}]} {
    %c0 = arith.constant 0 : index
    %c0_0 = arith.constant 0 : index
    %0 = vector.load %arg1[%c0, %c0_0] : memref<8x16xf32, #tpu.memory_space<vmem>>, vector<8x16xf32>
    %c0_1 = arith.constant 0 : index
    %c0_2 = arith.constant 0 : index
    %1 = vector.load %arg3[%c0_1, %c0_2] : memref<16x30xf32, #tpu.memory_space<vmem>>, vector<16x30xf32>
    %cst = arith.constant dense<0.000000e+00> : vector<8x30xf32>
    %2 = tpu.matmul %0, %1, %cst {dimension_numbers = #tpu.dot_dimension_numbers<[1], [0], [0], [1], [0, 0, 1, 1], [], []>} : vector<8x16xf32>, vector<16x30xf32>, vector<8x30xf32> -> vector<8x30xf32>
    %c0_3 = arith.constant 0 : index
    %c0_4 = arith.constant 0 : index
    %3 = vector.load %arg2[%c0_3, %c0_4] : memref<8x4xf32, #tpu.memory_space<vmem>>, vector<8x4xf32>
    %c0_5 = arith.constant 0 : index
    %c0_6 = arith.constant 0 : index
    %4 = vector.load %arg4[%c0_5, %c0_6] : memref<4x30xf32, #tpu.memory_space<vmem>>, vector<4x30xf32>
    %cst_7 = arith.constant dense<0.000000e+00> : vector<8x30xf32>
    %5 = tpu.matmul %3, %4, %cst_7 {dimension_numbers = #tpu.dot_dimension_numbers<[1], [0], [0], [1], [0, 0, 1, 1], [], []>} : vector<8x4xf32>, vector<4x30xf32>, vector<8x30xf32> -> vector<8x30xf32>
    %6 = arith.addf %2, %5 : vector<8x30xf32>
    %c0_8 = arith.constant 0 : index
    %c0_9 = arith.constant 0 : index
    %7 = vector.load %arg5[%c0_8, %c0_9] : memref<1x30xf32, #tpu.memory_space<vmem>>, vector<1x30xf32>
    %8 = vector.broadcast %7 : vector<1x30xf32> to vector<8x30xf32>
    %9 = arith.addf %6, %8 : vector<8x30xf32>
    %cst_10 = arith.constant 0.000000e+00 : f32
    %10 = vector.broadcast %cst_10 : f32 to vector<8x30xf32>
    %11 = arith.maximumf %9, %10 : vector<8x30xf32>
    %c0_11 = arith.constant 0 : index
    %c0_12 = arith.constant 0 : index
    %12 = vector.load %arg6[%c0_11, %c0_12] : memref<1x30xf32, #tpu.memory_space<vmem>>, vector<1x30xf32>
    %13 = vector.broadcast %12 : vector<1x30xf32> to vector<8x30xf32>
    %14 = arith.mulf %11, %13 : vector<8x30xf32>
    %cst_13 = arith.constant dense<0.000000e+00> : vector<8xf32>
    %15 = vector.multi_reduction <add>, %14, %cst_13 [1] : vector<8x30xf32> to vector<8xf32>
    %16 = vector.shape_cast %15 : vector<8xf32> to vector<8x1xf32>
    %c0_14 = arith.constant 0 : index
    %c0_15 = arith.constant 0 : index
    %17 = memref.load %arg7[%c0_14, %c0_15] : memref<1x1xf32, #tpu.memory_space<smem>>
    %18 = vector.broadcast %17 : f32 to vector<8x1xf32>
    %19 = arith.addf %16, %18 : vector<8x1xf32>
    %c0_16 = arith.constant 0 : index
    %c0_17 = arith.constant 0 : index
    %20 = vector.load %arg8[%c0_16, %c0_17] : memref<8x1xf32, #tpu.memory_space<vmem>>, vector<8x1xf32>
    tpu.vector_store %arg8[%c0_16, %c0_17], %19 {strides = array<i32>} : memref<8x1xf32, #tpu.memory_space<vmem>>, vector<8x1xf32>,
    return
  }
  func.func @transform_0(%arg0: i32) -> (i32, i32) {
    %c0_i32 = arith.constant 0 : i32
    %c0_i32_0 = arith.constant 0 : i32
    return %arg0, %c0_i32 : i32, i32
  }
  func.func @transform_1(%arg0: i32) -> (i32, i32) {
    %c0_i32 = arith.constant 0 : i32
    %c0_i32_0 = arith.constant 0 : i32
    return %arg0, %c0_i32 : i32, i32
  }
  func.func @transform_2(%arg0: i32) -> (i32, i32) {
    %c0_i32 = arith.constant 0 : i32
    %c0_i32_0 = arith.constant 0 : i32
    %c0_i32_1 = arith.constant 0 : i32
    return %c0_i32, %c0_i32_0 : i32, i32
  }
  func.func @transform_3(%arg0: i32) -> (i32, i32) {
    %c0_i32 = arith.constant 0 : i32
    %c0_i32_0 = arith.constant 0 : i32
    %c0_i32_1 = arith.constant 0 : i32
    return %c0_i32, %c0_i32_0 : i32, i32
  }
  func.func @transform_4(%arg0: i32) -> (i32, i32) {
    %c0_i32 = arith.constant 0 : i32
    %c0_i32_0 = arith.constant 0 : i32
    %c0_i32_1 = arith.constant 0 : i32
    return %c0_i32, %c0_i32_0 : i32, i32
  }
  func.func @transform_5(%arg0: i32) -> (i32, i32) {
    %c0_i32 = arith.constant 0 : i32
    %c0_i32_0 = arith.constant 0 : i32
    %c0_i32_1 = arith.constant 0 : i32
    return %c0_i32, %c0_i32_0 : i32, i32
  }
  func.func @transform_6(%arg0: i32) -> (i32, i32) {
    %c0_i32 = arith.constant 0 : i32
    %c0_i32_0 = arith.constant 0 : i32
    %c0_i32_1 = arith.constant 0 : i32
    return %c0_i32, %c0_i32_0 : i32, i32
  }
  func.func @transform_7(%arg0: i32) -> (i32, i32) {
    %c0_i32 = arith.constant 0 : i32
    %c0_i32_0 = arith.constant 0 : i32
    return %arg0, %c0_i32 : i32, i32
  }
}

</mosaic_0001>

<llo_original>
// kernel: tpu_custom_call.1
$region0: #{tpu_custom_call.1}
  #allocation0 [shape = 'u32[]', space=smem, size = 0x4, offset = 0x4, fixed_abs, tag = 'smem constant byte address 0x4 - core index']
  #allocation1 [shape = 'u32[144,128]{1,0:T(1,128)}', space=vmem, size = 0x12000, scoped, tag = 'internal scratch']
  #allocation2 [shape = 'f32[1,1]{1,0:T(1,128)S(6)}', space=smem, size = 0x200, scoped, tag = 'scoped memory for tpu_custom_call.1']
  %s0 = inlined_call_operand.hbm [shape: f32[8,16], index: 0, kind: input, shape index: {}]
  %s1 = inlined_call_operand.hbm [shape: f32[8,4], index: 1, kind: input, shape index: {}]
  %s2 = inlined_call_operand.hbm [shape: f32[16,30], index: 2, kind: input, shape index: {}]
  %s3 = inlined_call_operand.hbm [shape: f32[4,30], index: 3, kind: input, shape index: {}]
  %s4 = inlined_call_operand.hbm [shape: f32[1,30], index: 4, kind: input, shape index: {}]
  %s5 = inlined_call_operand.hbm [shape: f32[1,30], index: 5, kind: input, shape index: {}]
  %s6 = inlined_call_operand.<no memory space> [shape: f32[1,1], index: 6, kind: input, shape index: {}]
  %s7 = inlined_call_operand.hbm [shape: f32[8,1], index: 7, kind: output, shape index: {}]
  %s8 = sld [smem:[#allocation0]]
  $region62: #{tpu_custom_call.1} parent=0
    _
  %s10 = ssub.s32 1, %s8
  %s11 = scalar_select 0, %s10, %s8
  %12 = sst [smem:[#allocation2]] %s6
  $region1: #{tpu_custom_call.1} parent=0
    #allocation3 [shape = 'u8[4096]{0}', space=vmem, size = 0x1000, scoped, tag = 'input window, operand 0, single buffered']
    #allocation4 [shape = 's32[1]{0}', space=sflag, size = 0x4, scoped, tag = 'scoped memory for tpu_custom_call.1']
    #allocation5 [shape = 's32[1]{0}', space=sflag, size = 0x4, scoped, tag = 'scoped memory for tpu_custom_call.1']
    #allocation6 [shape = 'u8[4096]{0}', space=vmem, size = 0x1000, scoped, tag = 'input window, operand 1, single buffered']
    #allocation7 [shape = 's32[1]{0}', space=sflag, size = 0x4, scoped, tag = 'scoped memory for tpu_custom_call.1']
    #allocation8 [shape = 'u8[8192]{0}', space=vmem, size = 0x2000, scoped, tag = 'input window, operand 2, single buffered']
    #allocation9 [shape = 'u8[2048]{0}', space=vmem, size = 0x800, scoped, tag = 'input window, operand 3, single buffered']
    #allocation10 [shape = 's32[1]{0}', space=sflag, size = 0x4, scoped, tag = 'scoped memory for tpu_custom_call.1']
    #allocation11 [shape = 'u8[512]{0}', space=vmem, size = 0x400, scoped, tag = 'input window, operand 4, single buffered']
    #allocation12 [shape = 'u8[512]{0}', space=vmem, size = 0x400, scoped, tag = 'input window, operand 5, single buffered']
    #allocation13 [shape = 's32[1]{0}', space=sflag, size = 0x4, scoped, tag = 'scoped memory for tpu_custom_call.1']
    #allocation14 [shape = 'u8[4096]{0}', space=vmem, size = 0x1000, scoped, tag = 'output window, operand 0, single buffered']
    %13 = vsyncpa [#allocation4], 0
    %14 = vsyncpa [#allocation7], 0
    %15 = vsyncpa [#allocation10], 0
    %16 = vsyncpa [#allocation13], 0
    %17 = vsyncpa [#allocation5], 0
    // Predicated region
    $region2: #{tpu_custom_call.1} parent=1 // pred_check
      _
    $region3: #{tpu_custom_call.1} parent=1 // pred_check_branch
      %19 = sbr.rel (0) target = $region5
    $region4: #{tpu_custom_call.1} parent=1 // pred_region
      %s21 = ssub.s32 128, 128
      %22 = vsyncadd [#allocation4], %s21
      %s24 = sshll.u32 [#allocation3], 4
      %s25 = int_to_ptr.vmem [resolvable:$true] %s24
      %27 = dma.hbm_to_vmem [thread:$0]  %s0, 128, %s25, [#allocation4]
    $region5: #{tpu_custom_call.1} parent=1 // pred_fallthru
      _
    // Predicated region
    $region6: #{tpu_custom_call.1} parent=1 // pred_check
      _
    $region7: #{tpu_custom_call.1} parent=1 // pred_check_branch
      %29 = sbr.rel (0) target = $region9
    $region8: #{tpu_custom_call.1} parent=1 // pred_region
      %s31 = ssub.s32 128, 128
      %32 = vsyncadd [#allocation7], %s31
      %s34 = sshll.u32 [#allocation6], 4
      %s35 = int_to_ptr.vmem [resolvable:$true] %s34
      %37 = dma.hbm_to_vmem [thread:$0]  %s1, 128, %s35, [#allocation7]
    $region9: #{tpu_custom_call.1} parent=1 // pred_fallthru
      _
    // Predicated region
    $region10: #{tpu_custom_call.1} parent=1 // pred_check
      _
    $region11: #{tpu_custom_call.1} parent=1 // pred_check_branch
      %39 = sbr.rel (0) target = $region13
    $region12: #{tpu_custom_call.1} parent=1 // pred_region
      %s41 = ssub.s32 256, 256
      %42 = vsyncadd [#allocation7], %s41
      %s43 = sshll.u32 [#allocation8], 4
      %s44 = int_to_ptr.vmem [resolvable:$true] %s43
      %49 = dma.hbm_to_vmem [thread:$0]  %s2, 256, %s44, [#allocation7], 128, 128, 8
    $region13: #{tpu_custom_call.1} parent=1 // pred_fallthru
      _
    // Predicated region
    $region14: #{tpu_custom_call.1} parent=1 // pred_check
      _
    $region15: #{tpu_custom_call.1} parent=1 // pred_check_branch
      %51 = sbr.rel (0) target = $region17
    $region16: #{tpu_custom_call.1} parent=1 // pred_region
      %s53 = ssub.s32 64, 64
      %54 = vsyncadd [#allocation10], %s53
      %s56 = sshll.u32 [#allocation9], 4
      %s57 = int_to_ptr.vmem [resolvable:$true] %s56
      %59 = dma.hbm_to_vmem [thread:$0]  %s3, 64, %s57, [#allocation10]
    $region17: #{tpu_custom_call.1} parent=1 // pred_fallthru
      _
    // Predicated region
    $region18: #{tpu_custom_call.1} parent=1 // pred_check
      _
    $region19: #{tpu_custom_call.1} parent=1 // pred_check_branch
      %61 = sbr.rel (0) target = $region21
    $region20: #{tpu_custom_call.1} parent=1 // pred_region
      %s63 = ssub.s32 16, 16
      %64 = vsyncadd [#allocation10], %s63
      %s66 = sshll.u32 [#allocation11], 4
      %s67 = int_to_ptr.vmem [resolvable:$true] %s66
      %69 = dma.hbm_to_vmem [thread:$0]  %s4, 16, %s67, [#allocation10]
    $region21: #{tpu_custom_call.1} parent=1 // pred_fallthru
      _
    // Predicated region
    $region22: #{tpu_custom_call.1} parent=1 // pred_check
      _
    $region23: #{tpu_custom_call.1} parent=1 // pred_check_branch
      %71 = sbr.rel (0) target = $region25
    $region24: #{tpu_custom_call.1} parent=1 // pred_region
      %s73 = ssub.s32 16, 16
      %74 = vsyncadd [#allocation13], %s73
      %s76 = sshll.u32 [#allocation12], 4
      %s77 = int_to_ptr.vmem [resolvable:$true] %s76
      %79 = dma.hbm_to_vmem [thread:$0]  %s5, 16, %s77, [#allocation13]
    $region25: #{tpu_custom_call.1} parent=1 // pred_fallthru
      _
    // Predicated region
    $region26: #{tpu_custom_call.1} parent=1 // pred_check
      _
    $region27: #{tpu_custom_call.1} parent=1 // pred_check_branch
      %81 = sbr.rel (0) target = $region29
    $region28: #{tpu_custom_call.1} parent=1 // pred_region
      _
    $region29: #{tpu_custom_call.1} parent=1 // pred_fallthru
      _
    // Predicated region
    $region30: #{tpu_custom_call.1} parent=1 // pred_check
      _
    $region31: #{tpu_custom_call.1} parent=1 // pred_check_branch
      %83 = sbr.rel (0) target = $region33
    $region32: #{tpu_custom_call.1} parent=1 // pred_region
      %84 = dma.done [#allocation4], 128
    $region33: #{tpu_custom_call.1} parent=1 // pred_fallthru
      _
    // Predicated region
    $region34: #{tpu_custom_call.1} parent=1 // pred_check
      _
    $region35: #{tpu_custom_call.1} parent=1 // pred_check_branch
      %86 = sbr.rel (0) target = $region37
    $region36: #{tpu_custom_call.1} parent=1 // pred_region
      %87 = dma.done [#allocation7], 128
    $region37: #{tpu_custom_call.1} parent=1 // pred_fallthru
      _
    // Predicated region
    $region38: #{tpu_custom_call.1} parent=1 // pred_check
      _
    $region39: #{tpu_custom_call.1} parent=1 // pred_check_branch
      %89 = sbr.rel (0) target = $region41
    $region40: #{tpu_custom_call.1} parent=1 // pred_region
      %90 = dma.done [#allocation7], 256
    $region41: #{tpu_custom_call.1} parent=1 // pred_fallthru
      _
    // Predicated region
    $region42: #{tpu_custom_call.1} parent=1 // pred_check
      _
    $region43: #{tpu_custom_call.1} parent=1 // pred_check_branch
      %92 = sbr.rel (0) target = $region45
    $region44: #{tpu_custom_call.1} parent=1 // pred_region
      %93 = dma.done [#allocation10], 64
    $region45: #{tpu_custom_call.1} parent=1 // pred_fallthru
      _
    // Predicated region
    $region46: #{tpu_custom_call.1} parent=1 // pred_check
      _
    $region47: #{tpu_custom_call.1} parent=1 // pred_check_branch
      %95 = sbr.rel (0) target = $region49
    $region48: #{tpu_custom_call.1} parent=1 // pred_region
      %96 = dma.done [#allocation10], 16
    $region49: #{tpu_custom_call.1} parent=1 // pred_fallthru
      _
    // Predicated region
    $region50: #{tpu_custom_call.1} parent=1 // pred_check
      _
    $region51: #{tpu_custom_call.1} parent=1 // pred_check_branch
      %98 = sbr.rel (0) target = $region53
    $region52: #{tpu_custom_call.1} parent=1 // pred_region
      %99 = dma.done [#allocation13], 16
    $region53: #{tpu_custom_call.1} parent=1 // pred_fallthru
      _
    %v100 = vld [vmem:[#allocation3] sm:$0xff]
    %v101 = vld [vmem:[#allocation8] sm:$0xff]
    %v102 = vld [vmem:[#allocation8 + $0x8] sm:$0xff]
    %v103 = vld [vmem:[#allocation6] sm:$0xff]
    %v104 = vld [vmem:[#allocation9] sm:$0xf]
    %vm105 = vcmask 31744
    %v107 = vsel %vm105, %v103, 0
    %vm109 = vcmask 1043456
    %v111 = vsel %vm109, %v104, 0
    %113 = vmatprep.subr.mxu0 0.0
    %114 = vmatpush1.msra.mxu0 %v111
    %115 = vmatprep.subr.mxu0 0.0
    %116 = vmatpush1.msra.mxu0 0.0
    %117 = vmatprep.subr.mxu0 0.0
    %118 = vmatpush1.msra.mxu0 0.0
    %119 = vmatprep.subr.mxu0 0.0
    %120 = vmatpush1.msra.mxu0 0.0
    %121 = vmatprep.subr.mxu0 0.0
    %122 = vmatpush1.msra.mxu0 0.0
    %123 = vmatprep.subr.mxu0 0.0
    %124 = vmatpush1.msra.mxu0 0.0
    %125 = vmatprep.subr.mxu0 0.0
    %126 = vmatpush1.msra.mxu0 0.0
    %127 = vmatprep.subr.mxu0 0.0
    %128 = vmatpush1.msra.mxu0 0.0
    %129 = vmatprep.subr.mxu0 0.0
    %130 = vmatpush1.msra.mxu0 0.0
    %131 = vmatprep.subr.mxu0 0.0
    %132 = vmatpush1.msra.mxu0 0.0
    %133 = vmatprep.subr.mxu0 0.0
    %134 = vmatpush1.msra.mxu0 0.0
    %135 = vmatprep.subr.mxu0 0.0
    %136 = vmatpush1.msra.mxu0 0.0
    %137 = vmatprep.subr.mxu0 0.0
    %138 = vmatpush1.msra.mxu0 0.0
    %139 = vmatprep.subr.mxu0 0.0
    %140 = vmatpush1.msra.mxu0 0.0
    %141 = vmatprep.subr.mxu0 0.0
    %142 = vmatpush1.msra.mxu0 0.0
    %143 = vmatprep.subr.mxu0 0.0
    %144 = vmatpush1.msra.mxu0 0.0
    %145 = vmatprep.subr.mxu0 0.0
    %146 = vmatpush1.msra.mxu0 0.0
    %147 = vmatprep.subr.mxu0 0.0
    %148 = vmatpush1.msra.mxu0 0.0
    %149 = vmatprep.subr.mxu0 0.0
    %150 = vmatpush1.msra.mxu0 0.0
    %151 = vmatprep.subr.mxu0 0.0
    %152 = vmatpush1.msra.mxu0 0.0
    %153 = vmatprep.subr.mxu0 0.0
    %154 = vmatpush1.msra.mxu0 0.0
    %155 = vmatprep.subr.mxu0 0.0
    %156 = vmatpush1.msra.mxu0 0.0
    %157 = vmatprep.subr.mxu0 0.0
    %158 = vmatpush1.msra.mxu0 0.0
    %159 = vmatprep.subr.mxu0 0.0
    %160 = vmatpush1.msra.mxu0 0.0
    %161 = vmatprep.subr.mxu0 0.0
    %162 = vmatpush1.msra.mxu0 0.0
    %163 = vmatprep.subr.mxu0 0.0
    %164 = vmatpush1.msra.mxu0 0.0
    %165 = vmatprep.subr.mxu0 0.0
    %166 = vmatpush1.msra.mxu0 0.0
    %167 = vmatprep.subr.mxu0 0.0
    %168 = vmatpush1.msra.mxu0 0.0
    %169 = vmatprep.subr.mxu0 0.0
    %170 = vmatpush1.msra.mxu0 0.0
    %171 = vmatprep.subr.mxu0 0.0
    %172 = vmatpush1.msra.mxu0 0.0
    %173 = vmatprep.subr.mxu0 0.0
    %174 = vmatpush1.msra.mxu0 0.0
    %175 = vmatprep.subr.mxu0 0.0
    %176 = vmatpush1.msra.mxu0 0.0
    %177 = vmatprep.mubr.f32.mxu0 0.0
    %178 = vmatmul.mubr.f32.gmra.mrb[0].mxu0 %v107
    %v179 = vpop.f32.mrb[0].mxu0
    %v180 = vadd.f32 0.0, %v179
    %v181 = vpop.f32.mrb[0].mxu0
    %182 = vdwg.mxu0
    %vm183 = vcmask 130048
    %v185 = vsel %vm183, %v100, 0
    %187 = vmatprep.subr.mxu0 0.0
    %188 = vmatpush1.msra.mxu0 %v101
    %189 = vmatprep.subr.mxu0 0.0
    %190 = vmatpush1.msra.mxu0 %v102
    %191 = vmatprep.subr.mxu0 0.0
    %192 = vmatpush1.msra.mxu0 0.0
    %193 = vmatprep.subr.mxu0 0.0
    %194 = vmatpush1.msra.mxu0 0.0
    %195 = vmatprep.subr.mxu0 0.0
    %196 = vmatpush1.msra.mxu0 0.0
    %197 = vmatprep.subr.mxu0 0.0
    %198 = vmatpush1.msra.mxu0 0.0
    %199 = vmatprep.subr.mxu0 0.0
    %200 = vmatpush1.msra.mxu0 0.0
    %201 = vmatprep.subr.mxu0 0.0
    %202 = vmatpush1.msra.mxu0 0.0
    %203 = vmatprep.subr.mxu0 0.0
    %204 = vmatpush1.msra.mxu0 0.0
    %205 = vmatprep.subr.mxu0 0.0
    %206 = vmatpush1.msra.mxu0 0.0
    %207 = vmatprep.subr.mxu0 0.0
    %208 = vmatpush1.msra.mxu0 0.0
    %209 = vmatprep.subr.mxu0 0.0
    %210 = vmatpush1.msra.mxu0 0.0
    %211 = vmatprep.subr.mxu0 0.0
    %212 = vmatpush1.msra.mxu0 0.0
    %213 = vmatprep.subr.mxu0 0.0
    %214 = vmatpush1.msra.mxu0 0.0
    %215 = vmatprep.subr.mxu0 0.0
    %216 = vmatpush1.msra.mxu0 0.0
    %217 = vmatprep.subr.mxu0 0.0
    %218 = vmatpush1.msra.mxu0 0.0
    %219 = vmatprep.subr.mxu0 0.0
    %220 = vmatpush1.msra.mxu0 0.0
    %221 = vmatprep.subr.mxu0 0.0
    %222 = vmatpush1.msra.mxu0 0.0
    %223 = vmatprep.subr.mxu0 0.0
    %224 = vmatpush1.msra.mxu0 0.0
    %225 = vmatprep.subr.mxu0 0.0
    %226 = vmatpush1.msra.mxu0 0.0
    %227 = vmatprep.subr.mxu0 0.0
    %228 = vmatpush1.msra.mxu0 0.0
    %229 = vmatprep.subr.mxu0 0.0
    %230 = vmatpush1.msra.mxu0 0.0
    %231 = vmatprep.subr.mxu0 0.0
    %232 = vmatpush1.msra.mxu0 0.0
    %233 = vmatprep.subr.mxu0 0.0
    %234 = vmatpush1.msra.mxu0 0.0
    %235 = vmatprep.subr.mxu0 0.0
    %236 = vmatpush1.msra.mxu0 0.0
    %237 = vmatprep.subr.mxu0 0.0
    %238 = vmatpush1.msra.mxu0 0.0
    %239 = vmatprep.subr.mxu0 0.0
    %240 = vmatpush1.msra.mxu0 0.0
    %241 = vmatprep.subr.mxu0 0.0
    %242 = vmatpush1.msra.mxu0 0.0
    %243 = vmatprep.subr.mxu0 0.0
    %244 = vmatpush1.msra.mxu0 0.0
    %245 = vmatprep.subr.mxu0 0.0
    %246 = vmatpush1.msra.mxu0 0.0
    %247 = vmatprep.subr.mxu0 0.0
    %248 = vmatpush1.msra.mxu0 0.0
    %249 = vmatprep.subr.mxu0 0.0
    %250 = vmatpush1.msra.mxu0 0.0
    %251 = vmatprep.mubr.f32.mxu0 0.0
    %252 = vmatmul.mubr.f32.gmra.mrb[0].mxu0 %v185
    %v253 = vpop.f32.mrb[0].mxu0
    %v254 = vadd.f32 %v180, %v253
    %v255 = vpop.f32.mrb[0].mxu0
    %256 = vdwg.mxu0
    %v257 = vld [vmem:[#allocation11] sm:$0x1]
    %v259 = vlaneseq
    %v260 = vshrl.u32 %v259, 7
    %v261 = vsub.s32 0, %v260
    %v262 = vrot.slane %v257, %v261
    %v264 = vadd.f32 %v254, %v262
    %v265 = vmax.f32 %v264, 0.0
    %v266 = vld [vmem:[#allocation12] sm:$0x1]
    %v268 = vlaneseq
    %v269 = vshrl.u32 %v268, 7
    %v270 = vsub.s32 0, %v269
    %v271 = vrot.slane %v266, %v270
    %v273 = vmul.f32 %v265, %v271
    %vm274 = vcmask 244736
    %v275 = vsel %vm274, %v273, 0.0
    %276 = vadd.xlane.f32.xlu0 %v275
    %v277 = vpop.xlane.xlu0 %276
    %s278 = sld [smem:[#allocation2]]
    %v279 = vstv %s278
    %v280 = vadd.f32 %v277, %v279
    %vm281 = vcmask 7168
    %282 = vst.msk [vmem:[#allocation14] sm:$0xff] %vm281, %v280
    // Predicated region
    $region54: #{tpu_custom_call.1} parent=1 // pred_check
      _
    $region55: #{tpu_custom_call.1} parent=1 // pred_check_branch
      %284 = sbr.rel (0) target = $region57
    $region56: #{tpu_custom_call.1} parent=1 // pred_region
      %s286 = ssub.s32 128, 128
      %287 = vsyncadd [#allocation5], %s286
      %s289 = sshll.u32 [#allocation14], 4
      %s290 = int_to_ptr.vmem [resolvable:$true] %s289
      %292 = dma.vmem_to_hbm [thread:$0]  %s290, 128, %s7, [#allocation5]
    $region57: #{tpu_custom_call.1} parent=1 // pred_fallthru
      _
    // Predicated region
    $region58: #{tpu_custom_call.1} parent=1 // pred_check
      _
    $region59: #{tpu_custom_call.1} parent=1 // pred_check_branch
      %294 = sbr.rel (0) target = $region61
    $region60: #{tpu_custom_call.1} parent=1 // pred_region
      %295 = dma.done [#allocation5], 128
    $region61: #{tpu_custom_call.1} parent=1 // pred_fallthru
      _
    %296 = vsyncpa [#allocation4], 1
    %297 = vsyncpa [#allocation7], 1
    %298 = vsyncpa [#allocation10], 1
    %299 = vsyncpa [#allocation13], 1
    %300 = vsyncpa [#allocation5], 1

</llo_original>
